<compile_context>
chip_gen: v7x
topology: tpu7x:2x2x1
jax: 0.10.0
libtpu: 0.0.40
codegen_flags: <defaults>
</compile_context>

<pallas_src>
import jax
import jax.numpy as jnp
from jax import lax
from jax.experimental import pallas as pl
from jax.experimental.pallas import tpu as pltpu

HIDDEN = 32
INPUT = 1
NUM_LAYERS = 1


def rnn_kernel(x_ref, h0_ref, whh_ref, pack_ref, y_ref, hT_ref, hist_ref):
    # x_ref:    (B, S)        input sequence (input_size == 1), batch-first
    # h0_ref:   (B, H)        initial hidden state
    # whh_ref:  (H, H)        W_hh^T
    # pack_ref: (4, H)        row 0: W_ih (as a row), row 1: b_ih+b_hh,
    #                         row 2: Linear(H,1) weight row, row 3: b_out broadcast
    # y_ref:    (B, S)        per-step outputs (lane-dense, already batch-first)
    # hT_ref:   (B, H)        final hidden state
    # hist_ref: (S, B, H)     VMEM scratch: input projection, overwritten by hidden states
    S = hist_ref.shape[0]

    wih = pack_ref[0:1, :]      # (1, H)
    bias = pack_ref[1:2, :]     # (1, H)  = b_ih + b_hh
    wout = pack_ref[2:3, :]     # (1, H)
    bout = pack_ref[3:4, 0:1]   # (1, 1)

    # Hoisted input projection (no recurrence dependence): one vectorized op for all t,
    # written straight into the history scratch. Tiny in-kernel (B,S)->(S,B) relayout.
    x_sb = x_ref[...].T                                         # (S, B)
    hist_ref[...] = x_sb[:, :, None] * wih[None, :, :] + bias[None, :, :]

    # Serial tanh recurrence. h lives in the loop carry; per-step critical path is one
    # (B,H)x(H,H) MXU matmul + EUP tanh. hist[t] is read (projection) then overwritten
    # with the new hidden state for the deferred output projection.
    def body(t, h):
        h_new = jnp.tanh(hist_ref[t] + jnp.dot(h, whh_ref[...],
                                               preferred_element_type=jnp.float32))
        hist_ref[t] = h_new
        return h_new

    h_final = lax.fori_loop(0, S, body, h0_ref[...],
                            unroll=(S if S <= 8 else 8))
    hT_ref[...] = h_final

    # Deferred output projection Linear(H -> 1) for all (t, b) at once:
    # elementwise multiply + lane reduction, then one small transpose to a
    # lane-dense batch-first (B, S) store.
    proj = jnp.sum(hist_ref[...] * wout[None, :, :], axis=-1)   # (S, B)
    y_ref[...] = proj.T + bout                                  # (B, S)


def rnn_forward(X, h_state, params):
    """X: (batch, seq, 1) float32; h_state: (NUM_LAYERS, batch, HIDDEN) or None.
    Returns (outs, h_state_new) matching the PyTorch module:
      outs: (batch, seq, 1), h_state_new: (NUM_LAYERS, batch, HIDDEN)."""
    B, S, I = X.shape
    assert I == INPUT

    x2d = X.reshape(B, S).astype(jnp.float32)                    # (B, S), input_size == 1
    if h_state is None:
        h0 = jnp.zeros((B, HIDDEN), jnp.float32)
    else:
        h0 = h_state[0].astype(jnp.float32)                      # (B, H)

    whh_t = params["w_hh"].T.astype(jnp.float32)                 # (H, H) = W_hh^T

    # Pack the four tiny parameter vectors into one (4, H) slab -> single DMA.
    pack = jnp.stack(
        [params["w_ih"].reshape(HIDDEN),
         params["b_ih"] + params["b_hh"],
         params["w_out"].reshape(HIDDEN),
         jnp.full((HIDDEN,), params["b_out"].reshape(()))],
        axis=0).astype(jnp.float32)                              # (4, H)

    y, hT = pl.pallas_call(
        rnn_kernel,
        out_shape=(
            jax.ShapeDtypeStruct((B, S), jnp.float32),
            jax.ShapeDtypeStruct((B, HIDDEN), jnp.float32),
        ),
        in_specs=[pl.BlockSpec(memory_space=pltpu.VMEM)] * 4,
        out_specs=(
            pl.BlockSpec(memory_space=pltpu.VMEM),
            pl.BlockSpec(memory_space=pltpu.VMEM),
        ),
        scratch_shapes=[
            pltpu.VMEM((S, B, HIDDEN), jnp.float32),   # projection / hidden-state history
        ],
    )(x2d, h0, whh_t, pack)

    outs = y[:, :, None]            # (batch, seq, 1), already batch-first
    h_state_new = hT[None, :, :]    # (NUM_LAYERS, batch, HIDDEN)
    return outs, h_state_new


def init_params(key):
    """Deterministic init matching PyTorch shapes (uniform(-1/sqrt(H), 1/sqrt(H)))."""
    k = jax.random.split(key, 6)
    s = 1.0 / jnp.sqrt(jnp.float32(HIDDEN))
    u = lambda kk, shape: jax.random.uniform(kk, shape, jnp.float32, -s, s)
    return {
        "w_ih": u(k[0], (HIDDEN, INPUT)),
        "w_hh": u(k[1], (HIDDEN, HIDDEN)),
        "b_ih": u(k[2], (HIDDEN,)),
        "b_hh": u(k[3], (HIDDEN,)),
        "w_out": u(k[4], (1, HIDDEN)),
        "b_out": u(k[5], (1,)),
    }


def rnn_forward_ref(X, h_state, params):
    """Pure-JAX reference (lax.scan) for correctness check."""
    B, S, _ = X.shape
    h0 = jnp.zeros((B, HIDDEN), jnp.float32) if h_state is None else h_state[0]

    def step(h, x_t):
        h_new = jnp.tanh(x_t @ params["w_ih"].T + params["b_ih"]
                         + h @ params["w_hh"].T + params["b_hh"])
        y_t = h_new @ params["w_out"].T + params["b_out"]
        return h_new, y_t

    x_tm = jnp.transpose(X, (1, 0, 2))
    hT, y_tm = lax.scan(step, h0, x_tm)
    return jnp.transpose(y_tm, (1, 0, 2)), hT[None]


if __name__ == "__main__":
    key = jax.random.PRNGKey(0)
    kp, kx, kh = jax.random.split(key, 3)
    params = init_params(kp)

    batch, seq = 2, 8
    X = jax.random.normal(kx, (batch, seq, INPUT), jnp.float32)
    h_state = jax.random.normal(kh, (NUM_LAYERS, batch, HIDDEN), jnp.float32)

    # With a provided hidden state.
    outs, h_new = rnn_forward(X, h_state, params)
    outs = jax.block_until_ready(outs)
    h_new = jax.block_until_ready(h_new)
    outs_ref, h_ref = rnn_forward_ref(X, h_state, params)
    assert outs.shape == (batch, seq, 1)
    assert h_new.shape == (NUM_LAYERS, batch, HIDDEN)
    assert jnp.allclose(outs, outs_ref, atol=1e-4, rtol=1e-4)
    assert jnp.allclose(h_new, h_ref, atol=1e-4, rtol=1e-4)

    # With h_state = None (module's initial call).
    outs0, h0_new = rnn_forward(X, None, params)
    outs0 = jax.block_until_ready(outs0)
    h0_new = jax.block_until_ready(h0_new)
    outs0_ref, h0_ref = rnn_forward_ref(X, None, params)
    assert jnp.allclose(outs0, outs0_ref, atol=1e-4, rtol=1e-4)
    assert jnp.allclose(h0_new, h0_ref, atol=1e-4, rtol=1e-4)

    print("KERNEL_OK")
</pallas_src>

<mosaic_0001>
module attributes {stable_mosaic.version = 11 : i64} {
  func.func @rnn_kernel(%arg0: memref<2x8xf32, #tpu.memory_space<vmem>>, %arg1: memref<2x32xf32, #tpu.memory_space<vmem>>, %arg2: memref<32x32xf32, #tpu.memory_space<vmem>>, %arg3: memref<4x32xf32, #tpu.memory_space<vmem>>, %arg4: memref<2x8xf32, #tpu.memory_space<vmem>>, %arg5: memref<2x32xf32, #tpu.memory_space<vmem>>, %arg6: memref<8x2x32xf32, #tpu.memory_space<vmem>>) attributes {dimension_semantics = [], scalar_prefetch = 0 : i64, scratch_operands = 1 : i64, tpu.core_type = #tpu.core_type<tc>} {
    %c0 = arith.constant 0 : index
    %c0_0 = arith.constant 0 : index
    %0 = vector.load %arg3[%c0, %c0_0] : memref<4x32xf32, #tpu.memory_space<vmem>>, vector<1x32xf32>
    %c1 = arith.constant 1 : index
    %c0_1 = arith.constant 0 : index
    %1 = vector.load %arg3[%c1, %c0_1] : memref<4x32xf32, #tpu.memory_space<vmem>>, vector<1x32xf32>
    %c2 = arith.constant 2 : index
    %c0_2 = arith.constant 0 : index
    %2 = vector.load %arg3[%c2, %c0_2] : memref<4x32xf32, #tpu.memory_space<vmem>>, vector<1x32xf32>
    %c3 = arith.constant 3 : index
    %c0_3 = arith.constant 0 : index
    %3 = vector.load %arg3[%c3, %c0_3] : memref<4x32xf32, #tpu.memory_space<vmem>>, vector<1x1xf32>
    %c0_4 = arith.constant 0 : index
    %c0_5 = arith.constant 0 : index
    %4 = vector.load %arg0[%c0_4, %c0_5] : memref<2x8xf32, #tpu.memory_space<vmem>>, vector<2x8xf32>
    %5 = tpu.transpose %4, [1, 0] : vector<2x8xf32> -> vector<8x2xf32>
    %6 = vector.shape_cast %5 : vector<8x2xf32> to vector<8x2x1xf32>
    %7 = vector.shape_cast %0 : vector<1x32xf32> to vector<1x1x32xf32>
    %8 = vector.broadcast %6 : vector<8x2x1xf32> to vector<8x2x32xf32>
    %9 = vector.broadcast %7 : vector<1x1x32xf32> to vector<8x2x32xf32>
    %10 = arith.mulf %8, %9 : vector<8x2x32xf32>
    %11 = vector.shape_cast %1 : vector<1x32xf32> to vector<1x1x32xf32>
    %12 = vector.broadcast %11 : vector<1x1x32xf32> to vector<8x2x32xf32>
    %13 = arith.addf %10, %12 : vector<8x2x32xf32>
    %c0_6 = arith.constant 0 : index
    %c0_7 = arith.constant 0 : index
    %c0_8 = arith.constant 0 : index
    %14 = vector.load %arg6[%c0_6, %c0_7, %c0_8] : memref<8x2x32xf32, #tpu.memory_space<vmem>>, vector<8x2x32xf32>
    tpu.vector_store %arg6[%c0_6, %c0_7, %c0_8], %13 {strides = array<i32>} : memref<8x2x32xf32, #tpu.memory_space<vmem>>, vector<8x2x32xf32>,
    %c0_9 = arith.constant 0 : index
    %c0_10 = arith.constant 0 : index
    %15 = vector.load %arg1[%c0_9, %c0_10] : memref<2x32xf32, #tpu.memory_space<vmem>>, vector<2x32xf32>
    %c0_i32 = arith.constant 0 : i32
    %16 = arith.index_cast %c0_i32 : i32 to index
    %c0_11 = arith.constant 0 : index
    %c0_12 = arith.constant 0 : index
    %17 = vector.load %arg6[%16, %c0_11, %c0_12] : memref<8x2x32xf32, #tpu.memory_space<vmem>>, vector<1x2x32xf32>
    %18 = vector.shape_cast %17 : vector<1x2x32xf32> to vector<2x32xf32>
    %c0_13 = arith.constant 0 : index
    %c0_14 = arith.constant 0 : index
    %19 = vector.load %arg2[%c0_13, %c0_14] : memref<32x32xf32, #tpu.memory_space<vmem>>, vector<32x32xf32>
    %cst = arith.constant dense<0.000000e+00> : vector<2x32xf32>
    %20 = tpu.matmul %15, %19, %cst {dimension_numbers = #tpu.dot_dimension_numbers<[1], [0], [0], [1], [0, 0, 1, 1], [], []>} : vector<2x32xf32>, vector<32x32xf32>, vector<2x32xf32> -> vector<2x32xf32>
    %21 = arith.addf %18, %20 : vector<2x32xf32>
    %22 = math.tanh %21 : vector<2x32xf32>
    %23 = arith.index_cast %c0_i32 : i32 to index
    %c0_15 = arith.constant 0 : index
    %c0_16 = arith.constant 0 : index
    %24 = vector.load %arg6[%23, %c0_15, %c0_16] : memref<8x2x32xf32, #tpu.memory_space<vmem>>, vector<1x2x32xf32>
    %25 = vector.shape_cast %24 : vector<1x2x32xf32> to vector<2x32xf32>
    %26 = vector.shape_cast %22 : vector<2x32xf32> to vector<1x2x32xf32>
    tpu.vector_store %arg6[%23, %c0_15, %c0_16], %26 {strides = array<i32>} : memref<8x2x32xf32, #tpu.memory_space<vmem>>, vector<1x2x32xf32>,
    %c1_i32 = arith.constant 1 : i32
    %27 = arith.index_cast %c1_i32 : i32 to index
    %c0_17 = arith.constant 0 : index
    %c0_18 = arith.constant 0 : index
    %28 = vector.load %arg6[%27, %c0_17, %c0_18] : memref<8x2x32xf32, #tpu.memory_space<vmem>>, vector<1x2x32xf32>
    %29 = vector.shape_cast %28 : vector<1x2x32xf32> to vector<2x32xf32>
    %c0_19 = arith.constant 0 : index
    %c0_20 = arith.constant 0 : index
    %30 = vector.load %arg2[%c0_19, %c0_20] : memref<32x32xf32, #tpu.memory_space<vmem>>, vector<32x32xf32>
    %cst_21 = arith.constant dense<0.000000e+00> : vector<2x32xf32>
    %31 = tpu.matmul %22, %30, %cst_21 {dimension_numbers = #tpu.dot_dimension_numbers<[1], [0], [0], [1], [0, 0, 1, 1], [], []>} : vector<2x32xf32>, vector<32x32xf32>, vector<2x32xf32> -> vector<2x32xf32>
    %32 = arith.addf %29, %31 : vector<2x32xf32>
    %33 = math.tanh %32 : vector<2x32xf32>
    %34 = arith.index_cast %c1_i32 : i32 to index
    %c0_22 = arith.constant 0 : index
    %c0_23 = arith.constant 0 : index
    %35 = vector.load %arg6[%34, %c0_22, %c0_23] : memref<8x2x32xf32, #tpu.memory_space<vmem>>, vector<1x2x32xf32>
    %36 = vector.shape_cast %35 : vector<1x2x32xf32> to vector<2x32xf32>
    %37 = vector.shape_cast %33 : vector<2x32xf32> to vector<1x2x32xf32>
    tpu.vector_store %arg6[%34, %c0_22, %c0_23], %37 {strides = array<i32>} : memref<8x2x32xf32, #tpu.memory_space<vmem>>, vector<1x2x32xf32>,
    %c2_i32 = arith.constant 2 : i32
    %38 = arith.index_cast %c2_i32 : i32 to index
    %c0_24 = arith.constant 0 : index
    %c0_25 = arith.constant 0 : index
    %39 = vector.load %arg6[%38, %c0_24, %c0_25] : memref<8x2x32xf32, #tpu.memory_space<vmem>>, vector<1x2x32xf32>
    %40 = vector.shape_cast %39 : vector<1x2x32xf32> to vector<2x32xf32>
    %c0_26 = arith.constant 0 : index
    %c0_27 = arith.constant 0 : index
    %41 = vector.load %arg2[%c0_26, %c0_27] : memref<32x32xf32, #tpu.memory_space<vmem>>, vector<32x32xf32>
    %cst_28 = arith.constant dense<0.000000e+00> : vector<2x32xf32>
    %42 = tpu.matmul %33, %41, %cst_28 {dimension_numbers = #tpu.dot_dimension_numbers<[1], [0], [0], [1], [0, 0, 1, 1], [], []>} : vector<2x32xf32>, vector<32x32xf32>, vector<2x32xf32> -> vector<2x32xf32>
    %43 = arith.addf %40, %42 : vector<2x32xf32>
    %44 = math.tanh %43 : vector<2x32xf32>
    %45 = arith.index_cast %c2_i32 : i32 to index
    %c0_29 = arith.constant 0 : index
    %c0_30 = arith.constant 0 : index
    %46 = vector.load %arg6[%45, %c0_29, %c0_30] : memref<8x2x32xf32, #tpu.memory_space<vmem>>, vector<1x2x32xf32>
    %47 = vector.shape_cast %46 : vector<1x2x32xf32> to vector<2x32xf32>
    %48 = vector.shape_cast %44 : vector<2x32xf32> to vector<1x2x32xf32>
    tpu.vector_store %arg6[%45, %c0_29, %c0_30], %48 {strides = array<i32>} : memref<8x2x32xf32, #tpu.memory_space<vmem>>, vector<1x2x32xf32>,
    %c3_i32 = arith.constant 3 : i32
    %49 = arith.index_cast %c3_i32 : i32 to index
    %c0_31 = arith.constant 0 : index
    %c0_32 = arith.constant 0 : index
    %50 = vector.load %arg6[%49, %c0_31, %c0_32] : memref<8x2x32xf32, #tpu.memory_space<vmem>>, vector<1x2x32xf32>
    %51 = vector.shape_cast %50 : vector<1x2x32xf32> to vector<2x32xf32>
    %c0_33 = arith.constant 0 : index
    %c0_34 = arith.constant 0 : index
    %52 = vector.load %arg2[%c0_33, %c0_34] : memref<32x32xf32, #tpu.memory_space<vmem>>, vector<32x32xf32>
    %cst_35 = arith.constant dense<0.000000e+00> : vector<2x32xf32>
    %53 = tpu.matmul %44, %52, %cst_35 {dimension_numbers = #tpu.dot_dimension_numbers<[1], [0], [0], [1], [0, 0, 1, 1], [], []>} : vector<2x32xf32>, vector<32x32xf32>, vector<2x32xf32> -> vector<2x32xf32>
    %54 = arith.addf %51, %53 : vector<2x32xf32>
    %55 = math.tanh %54 : vector<2x32xf32>
    %56 = arith.index_cast %c3_i32 : i32 to index
    %c0_36 = arith.constant 0 : index
    %c0_37 = arith.constant 0 : index
    %57 = vector.load %arg6[%56, %c0_36, %c0_37] : memref<8x2x32xf32, #tpu.memory_space<vmem>>, vector<1x2x32xf32>
    %58 = vector.shape_cast %57 : vector<1x2x32xf32> to vector<2x32xf32>
    %59 = vector.shape_cast %55 : vector<2x32xf32> to vector<1x2x32xf32>
    tpu.vector_store %arg6[%56, %c0_36, %c0_37], %59 {strides = array<i32>} : memref<8x2x32xf32, #tpu.memory_space<vmem>>, vector<1x2x32xf32>,
    %c4_i32 = arith.constant 4 : i32
    %60 = arith.index_cast %c4_i32 : i32 to index
    %c0_38 = arith.constant 0 : index
    %c0_39 = arith.constant 0 : index
    %61 = vector.load %arg6[%60, %c0_38, %c0_39] : memref<8x2x32xf32, #tpu.memory_space<vmem>>, vector<1x2x32xf32>
    %62 = vector.shape_cast %61 : vector<1x2x32xf32> to vector<2x32xf32>
    %c0_40 = arith.constant 0 : index
    %c0_41 = arith.constant 0 : index
    %63 = vector.load %arg2[%c0_40, %c0_41] : memref<32x32xf32, #tpu.memory_space<vmem>>, vector<32x32xf32>
    %cst_42 = arith.constant dense<0.000000e+00> : vector<2x32xf32>
    %64 = tpu.matmul %55, %63, %cst_42 {dimension_numbers = #tpu.dot_dimension_numbers<[1], [0], [0], [1], [0, 0, 1, 1], [], []>} : vector<2x32xf32>, vector<32x32xf32>, vector<2x32xf32> -> vector<2x32xf32>
    %65 = arith.addf %62, %64 : vector<2x32xf32>
    %66 = math.tanh %65 : vector<2x32xf32>
    %67 = arith.index_cast %c4_i32 : i32 to index
    %c0_43 = arith.constant 0 : index
    %c0_44 = arith.constant 0 : index
    %68 = vector.load %arg6[%67, %c0_43, %c0_44] : memref<8x2x32xf32, #tpu.memory_space<vmem>>, vector<1x2x32xf32>
    %69 = vector.shape_cast %68 : vector<1x2x32xf32> to vector<2x32xf32>
    %70 = vector.shape_cast %66 : vector<2x32xf32> to vector<1x2x32xf32>
    tpu.vector_store %arg6[%67, %c0_43, %c0_44], %70 {strides = array<i32>} : memref<8x2x32xf32, #tpu.memory_space<vmem>>, vector<1x2x32xf32>,
    %c5_i32 = arith.constant 5 : i32
    %71 = arith.index_cast %c5_i32 : i32 to index
    %c0_45 = arith.constant 0 : index
    %c0_46 = arith.constant 0 : index
    %72 = vector.load %arg6[%71, %c0_45, %c0_46] : memref<8x2x32xf32, #tpu.memory_space<vmem>>, vector<1x2x32xf32>
    %73 = vector.shape_cast %72 : vector<1x2x32xf32> to vector<2x32xf32>
    %c0_47 = arith.constant 0 : index
    %c0_48 = arith.constant 0 : index
    %74 = vector.load %arg2[%c0_47, %c0_48] : memref<32x32xf32, #tpu.memory_space<vmem>>, vector<32x32xf32>
    %cst_49 = arith.constant dense<0.000000e+00> : vector<2x32xf32>
    %75 = tpu.matmul %66, %74, %cst_49 {dimension_numbers = #tpu.dot_dimension_numbers<[1], [0], [0], [1], [0, 0, 1, 1], [], []>} : vector<2x32xf32>, vector<32x32xf32>, vector<2x32xf32> -> vector<2x32xf32>
    %76 = arith.addf %73, %75 : vector<2x32xf32>
    %77 = math.tanh %76 : vector<2x32xf32>
    %78 = arith.index_cast %c5_i32 : i32 to index
    %c0_50 = arith.constant 0 : index
    %c0_51 = arith.constant 0 : index
    %79 = vector.load %arg6[%78, %c0_50, %c0_51] : memref<8x2x32xf32, #tpu.memory_space<vmem>>, vector<1x2x32xf32>
    %80 = vector.shape_cast %79 : vector<1x2x32xf32> to vector<2x32xf32>
    %81 = vector.shape_cast %77 : vector<2x32xf32> to vector<1x2x32xf32>
    tpu.vector_store %arg6[%78, %c0_50, %c0_51], %81 {strides = array<i32>} : memref<8x2x32xf32, #tpu.memory_space<vmem>>, vector<1x2x32xf32>,
    %c6_i32 = arith.constant 6 : i32
    %82 = arith.index_cast %c6_i32 : i32 to index
    %c0_52 = arith.constant 0 : index
    %c0_53 = arith.constant 0 : index
    %83 = vector.load %arg6[%82, %c0_52, %c0_53] : memref<8x2x32xf32, #tpu.memory_space<vmem>>, vector<1x2x32xf32>
    %84 = vector.shape_cast %83 : vector<1x2x32xf32> to vector<2x32xf32>
    %c0_54 = arith.constant 0 : index
    %c0_55 = arith.constant 0 : index
    %85 = vector.load %arg2[%c0_54, %c0_55] : memref<32x32xf32, #tpu.memory_space<vmem>>, vector<32x32xf32>
    %cst_56 = arith.constant dense<0.000000e+00> : vector<2x32xf32>
    %86 = tpu.matmul %77, %85, %cst_56 {dimension_numbers = #tpu.dot_dimension_numbers<[1], [0], [0], [1], [0, 0, 1, 1], [], []>} : vector<2x32xf32>, vector<32x32xf32>, vector<2x32xf32> -> vector<2x32xf32>
    %87 = arith.addf %84, %86 : vector<2x32xf32>
    %88 = math.tanh %87 : vector<2x32xf32>
    %89 = arith.index_cast %c6_i32 : i32 to index
    %c0_57 = arith.constant 0 : index
    %c0_58 = arith.constant 0 : index
    %90 = vector.load %arg6[%89, %c0_57, %c0_58] : memref<8x2x32xf32, #tpu.memory_space<vmem>>, vector<1x2x32xf32>
    %91 = vector.shape_cast %90 : vector<1x2x32xf32> to vector<2x32xf32>
    %92 = vector.shape_cast %88 : vector<2x32xf32> to vector<1x2x32xf32>
    tpu.vector_store %arg6[%89, %c0_57, %c0_58], %92 {strides = array<i32>} : memref<8x2x32xf32, #tpu.memory_space<vmem>>, vector<1x2x32xf32>,
    %c7_i32 = arith.constant 7 : i32
    %93 = arith.index_cast %c7_i32 : i32 to index
    %c0_59 = arith.constant 0 : index
    %c0_60 = arith.constant 0 : index
    %94 = vector.load %arg6[%93, %c0_59, %c0_60] : memref<8x2x32xf32, #tpu.memory_space<vmem>>, vector<1x2x32xf32>
    %95 = vector.shape_cast %94 : vector<1x2x32xf32> to vector<2x32xf32>
    %c0_61 = arith.constant 0 : index
    %c0_62 = arith.constant 0 : index
    %96 = vector.load %arg2[%c0_61, %c0_62] : memref<32x32xf32, #tpu.memory_space<vmem>>, vector<32x32xf32>
    %cst_63 = arith.constant dense<0.000000e+00> : vector<2x32xf32>
    %97 = tpu.matmul %88, %96, %cst_63 {dimension_numbers = #tpu.dot_dimension_numbers<[1], [0], [0], [1], [0, 0, 1, 1], [], []>} : vector<2x32xf32>, vector<32x32xf32>, vector<2x32xf32> -> vector<2x32xf32>
    %98 = arith.addf %95, %97 : vector<2x32xf32>
    %99 = math.tanh %98 : vector<2x32xf32>
    %100 = arith.index_cast %c7_i32 : i32 to index
    %c0_64 = arith.constant 0 : index
    %c0_65 = arith.constant 0 : index
    %101 = vector.load %arg6[%100, %c0_64, %c0_65] : memref<8x2x32xf32, #tpu.memory_space<vmem>>, vector<1x2x32xf32>
    %102 = vector.shape_cast %101 : vector<1x2x32xf32> to vector<2x32xf32>
    %103 = vector.shape_cast %99 : vector<2x32xf32> to vector<1x2x32xf32>
    tpu.vector_store %arg6[%100, %c0_64, %c0_65], %103 {strides = array<i32>} : memref<8x2x32xf32, #tpu.memory_space<vmem>>, vector<1x2x32xf32>,
    %c8_i32 = arith.constant 8 : i32
    %c0_66 = arith.constant 0 : index
    %c0_67 = arith.constant 0 : index
    %104 = vector.load %arg5[%c0_66, %c0_67] : memref<2x32xf32, #tpu.memory_space<vmem>>, vector<2x32xf32>
    tpu.vector_store %arg5[%c0_66, %c0_67], %99 {strides = array<i32>} : memref<2x32xf32, #tpu.memory_space<vmem>>, vector<2x32xf32>,
    %c0_68 = arith.constant 0 : index
    %c0_69 = arith.constant 0 : index
    %c0_70 = arith.constant 0 : index
    %105 = vector.load %arg6[%c0_68, %c0_69, %c0_70] : memref<8x2x32xf32, #tpu.memory_space<vmem>>, vector<8x2x32xf32>
    %106 = vector.shape_cast %2 : vector<1x32xf32> to vector<1x1x32xf32>
    %107 = vector.broadcast %106 : vector<1x1x32xf32> to vector<8x2x32xf32>
    %108 = arith.mulf %105, %107 : vector<8x2x32xf32>
    %cst_71 = arith.constant dense<0.000000e+00> : vector<8x2xf32>
    %109 = vector.multi_reduction <add>, %108, %cst_71 [2] : vector<8x2x32xf32> to vector<8x2xf32>
    %110 = tpu.transpose %109, [1, 0] : vector<8x2xf32> -> vector<2x8xf32>
    %111 = vector.broadcast %3 : vector<1x1xf32> to vector<2x8xf32>
    %112 = arith.addf %110, %111 : vector<2x8xf32>
    %c0_72 = arith.constant 0 : index
    %c0_73 = arith.constant 0 : index
    %113 = vector.load %arg4[%c0_72, %c0_73] : memref<2x8xf32, #tpu.memory_space<vmem>>, vector<2x8xf32>
    tpu.vector_store %arg4[%c0_72, %c0_73], %112 {strides = array<i32>} : memref<2x8xf32, #tpu.memory_space<vmem>>, vector<2x8xf32>,
    return
  }
}

</mosaic_0001>

<llo_original>
// kernel: tpu_custom_call.1
$region0: #{tpu_custom_call.1}
  #allocation0 [shape = 'u32[]', space=smem, size = 0x4, offset = 0x4, fixed_abs, tag = 'smem constant byte address 0x4 - core index']
  #allocation1 [shape = 'u32[144,128]{1,0:T(1,128)}', space=vmem, size = 0x12000, scoped, tag = 'internal scratch']
  #allocation2 [shape = 'f32[8,2,32]{2,1,0:T(2,128)}', space=vmem, size = 0x2000, scoped, tag = 'scratch operand']
  %s0 = inlined_call_operand.hbm [shape: f32[2,8], index: 0, kind: input, shape index: {}]
  %s1 = inlined_call_operand.vmem [shape: f32[2,32], index: 1, kind: input, shape index: {}]
  %s2 = inlined_call_operand.hbm [shape: f32[32,32], index: 2, kind: input, shape index: {}]
  %s3 = inlined_call_operand.vmem [shape: f32[4,32], index: 3, kind: input, shape index: {}]
  %s4 = inlined_call_operand.hbm [shape: f32[2,8], index: 4, kind: output, shape index: {0}]
  %s5 = inlined_call_operand.hbm [shape: f32[2,32], index: 5, kind: output, shape index: {1}]
  %6 = xla_tuple %s4, %s5
  %s7 = sld [smem:[#allocation0]]
  $region42: #{tpu_custom_call.1} parent=0
    _
  %s9 = ssub.s32 1, %s7
  %s10 = scalar_select 0, %s9, %s7
  $region1: #{tpu_custom_call.1} parent=0
    #allocation3 [shape = 'u8[1024]{0}', space=vmem, size = 0x400, scoped, tag = 'input window, operand 0, single buffered']
    #allocation4 [shape = 's32[1]{0}', space=sflag, size = 0x4, scoped, tag = 'scoped memory for tpu_custom_call.1']
    #allocation5 [shape = 's32[1]{0}', space=sflag, size = 0x4, scoped, tag = 'scoped memory for tpu_custom_call.1']
    #allocation6 [shape = 'u8[16384]{0}', space=vmem, size = 0x4000, scoped, tag = 'input window, operand 2, single buffered']
    #allocation7 [shape = 's32[1]{0}', space=sflag, size = 0x4, scoped, tag = 'scoped memory for tpu_custom_call.1']
    #allocation8 [shape = 'u8[1024]{0}', space=vmem, size = 0x400, scoped, tag = 'output window, operand 0, single buffered']
    #allocation9 [shape = 'u8[1024]{0}', space=vmem, size = 0x400, scoped, tag = 'output window, operand 1, single buffered']
    #allocation10 [shape = 's32[1]{0}', space=sflag, size = 0x4, scoped, tag = 'scoped memory for tpu_custom_call.1']
    %11 = vsyncpa [#allocation4], 0
    %12 = vsyncpa [#allocation7], 0
    %13 = vsyncpa [#allocation5], 0
    %14 = vsyncpa [#allocation10], 0
    // Predicated region
    $region2: #{tpu_custom_call.1} parent=1 // pred_check
      _
    $region3: #{tpu_custom_call.1} parent=1 // pred_check_branch
      %16 = sbr.rel (0) target = $region5
    $region4: #{tpu_custom_call.1} parent=1 // pred_region
      %s18 = ssub.s32 32, 32
      %19 = vsyncadd [#allocation4], %s18
      %s21 = sshll.u32 [#allocation3], 4
      %s22 = int_to_ptr.vmem [resolvable:$true] %s21
      %24 = dma.hbm_to_vmem [thread:$0]  %s0, 32, %s22, [#allocation4]
    $region5: #{tpu_custom_call.1} parent=1 // pred_fallthru
      _
    // Predicated region
    $region6: #{tpu_custom_call.1} parent=1 // pred_check
      _
    $region7: #{tpu_custom_call.1} parent=1 // pred_check_branch
      %26 = sbr.rel (0) target = $region9
    $region8: #{tpu_custom_call.1} parent=1 // pred_region
      _
    $region9: #{tpu_custom_call.1} parent=1 // pred_fallthru
      _
    // Predicated region
    $region10: #{tpu_custom_call.1} parent=1 // pred_check
      _
    $region11: #{tpu_custom_call.1} parent=1 // pred_check_branch
      %28 = sbr.rel (0) target = $region13
    $region12: #{tpu_custom_call.1} parent=1 // pred_region
      %s30 = ssub.s32 512, 512
      %31 = vsyncadd [#allocation7], %s30
      %s32 = sshll.u32 [#allocation6], 4
      %s33 = int_to_ptr.vmem [resolvable:$true] %s32
      %38 = dma.hbm_to_vmem [thread:$0]  %s2, 512, %s33, [#allocation7], 128, 128, 8
    $region13: #{tpu_custom_call.1} parent=1 // pred_fallthru
      _
    // Predicated region
    $region14: #{tpu_custom_call.1} parent=1 // pred_check
      _
    $region15: #{tpu_custom_call.1} parent=1 // pred_check_branch
      %40 = sbr.rel (0) target = $region17
    $region16: #{tpu_custom_call.1} parent=1 // pred_region
      _
    $region17: #{tpu_custom_call.1} parent=1 // pred_fallthru
      _
    // Predicated region
    $region18: #{tpu_custom_call.1} parent=1 // pred_check
      _
    $region19: #{tpu_custom_call.1} parent=1 // pred_check_branch
      %42 = sbr.rel (0) target = $region21
    $region20: #{tpu_custom_call.1} parent=1 // pred_region
      %43 = dma.done [#allocation4], 32
    $region21: #{tpu_custom_call.1} parent=1 // pred_fallthru
      _
    // Predicated region
    $region22: #{tpu_custom_call.1} parent=1 // pred_check
      _
    $region23: #{tpu_custom_call.1} parent=1 // pred_check_branch
      %45 = sbr.rel (0) target = $region25
    $region24: #{tpu_custom_call.1} parent=1 // pred_region
      %46 = dma.done [#allocation7], 512
    $region25: #{tpu_custom_call.1} parent=1 // pred_fallthru
      _
    %v47 = vld [vmem:[%s3] sm:$0x1]
    %v48 = vld [vmem:[%s3 + $0x1] sm:$0x1]
    %v49 = vld [vmem:[%s3 + $0x2] sm:$0x1]
    %v50 = vld [vmem:[%s3 + $0x3] sm:$0x1]
    %v51 = vld [vmem:[#allocation3] sm:$0x3]
    %52 = vxpose.xlu0.b32.start [1/16] %v51, 128
    %53 = vxpose.xlu0.b32.cont [2/16] 0.0, 128
    %54 = vxpose.xlu0.b32.cont [3/16] 0.0, 128
    %55 = vxpose.xlu0.b32.cont [4/16] 0.0, 128
    %56 = vxpose.xlu0.b32.cont [5/16] 0.0, 128
    %57 = vxpose.xlu0.b32.cont [6/16] 0.0, 128
    %58 = vxpose.xlu0.b32.cont [7/16] 0.0, 128
    %59 = vxpose.xlu0.b32.cont [8/16] 0.0, 128
    %60 = vxpose.xlu0.b32.cont [9/16] 0.0, 128
    %61 = vxpose.xlu0.b32.cont [10/16] 0.0, 128
    %62 = vxpose.xlu0.b32.cont [11/16] 0.0, 128
    %63 = vxpose.xlu0.b32.cont [12/16] 0.0, 128
    %64 = vxpose.xlu0.b32.cont [13/16] 0.0, 128
    %65 = vxpose.xlu0.b32.cont [14/16] 0.0, 128
    %66 = vxpose.xlu0.b32.cont [15/16] 0.0, 128
    %67 = vxpose.xlu0.b32.end [16/16] 0.0, 128
    %v68 = vpop.trf.xlu0
    %v69 = vpop.trf.xlu0
    %v70 = vpop.trf.xlu0
    %v71 = vpop.trf.xlu0
    %v72 = vpop.trf.xlu0
    %v73 = vpop.trf.xlu0
    %v74 = vpop.trf.xlu0
    %v75 = vpop.trf.xlu0
    %v76 = vpop.trf.xlu0
    %v77 = vpop.trf.xlu0
    %v78 = vpop.trf.xlu0
    %v79 = vpop.trf.xlu0
    %v80 = vpop.trf.xlu0
    %v81 = vpop.trf.xlu0
    %v82 = vpop.trf.xlu0
    %v83 = vpop.trf.xlu0
    %v84 = vlaneseq
    %v85 = vshrl.u32 %v84, 7
    %v86 = vsub.s32 0, %v85
    %v87 = vrot.slane %v68, %v86
    %89 = vbcast.lane.b32.xlu0 %v87, 256
    %v90 = vpop.permute.xlu0 %89
    %v91 = vlaneseq
    %v92 = vshrl.u32 %v91, 7
    %v93 = vsub.s32 1, %v92
    %v94 = vrot.slane %v68, %v93
    %96 = vbcast.lane.b32.xlu0 %v94, 256
    %v97 = vpop.permute.xlu0 %96
    %v98 = vlaneseq
    %v99 = vshrl.u32 %v98, 7
    %v100 = vsub.s32 2, %v99
    %v101 = vrot.slane %v68, %v100
    %103 = vbcast.lane.b32.xlu0 %v101, 256
    %v104 = vpop.permute.xlu0 %103
    %v105 = vlaneseq
    %v106 = vshrl.u32 %v105, 7
    %v107 = vsub.s32 3, %v106
    %v108 = vrot.slane %v68, %v107
    %110 = vbcast.lane.b32.xlu0 %v108, 256
    %v111 = vpop.permute.xlu0 %110
    %v112 = vlaneseq
    %v113 = vshrl.u32 %v112, 7
    %v114 = vsub.s32 4, %v113
    %v115 = vrot.slane %v68, %v114
    %117 = vbcast.lane.b32.xlu0 %v115, 256
    %v118 = vpop.permute.xlu0 %117
    %v119 = vlaneseq
    %v120 = vshrl.u32 %v119, 7
    %v121 = vsub.s32 5, %v120
    %v122 = vrot.slane %v68, %v121
    %124 = vbcast.lane.b32.xlu0 %v122, 256
    %v125 = vpop.permute.xlu0 %124
    %v126 = vlaneseq
    %v127 = vshrl.u32 %v126, 7
    %v128 = vsub.s32 6, %v127
    %v129 = vrot.slane %v68, %v128
    %131 = vbcast.lane.b32.xlu0 %v129, 256
    %v132 = vpop.permute.xlu0 %131
    %v133 = vlaneseq
    %v134 = vshrl.u32 %v133, 7
    %v135 = vsub.s32 7, %v134
    %v136 = vrot.slane %v68, %v135
    %138 = vbcast.lane.b32.xlu0 %v136, 256
    %v139 = vpop.permute.xlu0 %138
    %v140 = vlaneseq
    %v141 = vshrl.u32 %v140, 7
    %v142 = vsub.s32 0, %v141
    %v143 = vrot.slane %v47, %v142
    %v144 = vmul.f32 %v90, %v143
    %v145 = vmul.f32 %v97, %v143
    %v146 = vmul.f32 %v104, %v143
    %v147 = vmul.f32 %v111, %v143
    %v148 = vmul.f32 %v118, %v143
    %v149 = vmul.f32 %v125, %v143
    %v150 = vmul.f32 %v132, %v143
    %v151 = vmul.f32 %v139, %v143
    %v152 = vlaneseq
    %v153 = vshrl.u32 %v152, 7
    %v154 = vsub.s32 0, %v153
    %v155 = vrot.slane %v48, %v154
    %v156 = vadd.f32 %v144, %v155
    %v157 = vadd.f32 %v145, %v155
    %v158 = vadd.f32 %v146, %v155
    %v159 = vadd.f32 %v147, %v155
    %v160 = vadd.f32 %v148, %v155
    %v161 = vadd.f32 %v149, %v155
    %v162 = vadd.f32 %v150, %v155
    %v163 = vadd.f32 %v151, %v155
    %vm164 = vcmask 254976
    %165 = vst.msk [vmem:[#allocation2] sm:$0x3] %vm164, %v156
    %166 = vst.msk [vmem:[#allocation2 + $0x2] sm:$0x3] %vm164, %v157
    %167 = vst.msk [vmem:[#allocation2 + $0x4] sm:$0x3] %vm164, %v158
    %168 = vst.msk [vmem:[#allocation2 + $0x6] sm:$0x3] %vm164, %v159
    %169 = vst.msk [vmem:[#allocation2 + $0x8] sm:$0x3] %vm164, %v160
    %170 = vst.msk [vmem:[#allocation2 + $0xa] sm:$0x3] %vm164, %v161
    %171 = vst.msk [vmem:[#allocation2 + $0xc] sm:$0x3] %vm164, %v162
    %172 = vst.msk [vmem:[#allocation2 + $0xe] sm:$0x3] %vm164, %v163
    %v173 = vld [vmem:[%s1] sm:$0x3]
    %v174 = vld [vmem:[#allocation2] sm:$0x3]
    %v175 = vld [vmem:[#allocation6] sm:$0xff]
    %v176 = vld [vmem:[#allocation6 + $0x8] sm:$0xff]
    %v177 = vld [vmem:[#allocation6 + $0x10] sm:$0xff]
    %v178 = vld [vmem:[#allocation6 + $0x18] sm:$0xff]
    %vm179 = vcmask 261120
    %v181 = vsel %vm179, %v173, 0
    %183 = vmatprep.subr.mxu0 0.0
    %184 = vmatpush1.msra.mxu0 %v175
    %185 = vmatprep.subr.mxu0 0.0
    %186 = vmatpush1.msra.mxu0 %v176
    %187 = vmatprep.subr.mxu0 0.0
    %188 = vmatpush1.msra.mxu0 %v177
    %189 = vmatprep.subr.mxu0 0.0
    %190 = vmatpush1.msra.mxu0 %v178
    %191 = vmatprep.subr.mxu0 0.0
    %192 = vmatpush1.msra.mxu0 0.0
    %193 = vmatprep.subr.mxu0 0.0
    %194 = vmatpush1.msra.mxu0 0.0
    %195 = vmatprep.subr.mxu0 0.0
    %196 = vmatpush1.msra.mxu0 0.0
    %197 = vmatprep.subr.mxu0 0.0
    %198 = vmatpush1.msra.mxu0 0.0
    %199 = vmatprep.subr.mxu0 0.0
    %200 = vmatpush1.msra.mxu0 0.0
    %201 = vmatprep.subr.mxu0 0.0
    %202 = vmatpush1.msra.mxu0 0.0
    %203 = vmatprep.subr.mxu0 0.0
    %204 = vmatpush1.msra.mxu0 0.0
    %205 = vmatprep.subr.mxu0 0.0
    %206 = vmatpush1.msra.mxu0 0.0
    %207 = vmatprep.subr.mxu0 0.0
    %208 = vmatpush1.msra.mxu0 0.0
    %209 = vmatprep.subr.mxu0 0.0
    %210 = vmatpush1.msra.mxu0 0.0
    %211 = vmatprep.subr.mxu0 0.0
    %212 = vmatpush1.msra.mxu0 0.0
    %213 = vmatprep.subr.mxu0 0.0
    %214 = vmatpush1.msra.mxu0 0.0
    %215 = vmatprep.subr.mxu0 0.0
    %216 = vmatpush1.msra.mxu0 0.0
    %217 = vmatprep.subr.mxu0 0.0
    %218 = vmatpush1.msra.mxu0 0.0
    %219 = vmatprep.subr.mxu0 0.0
    %220 = vmatpush1.msra.mxu0 0.0
    %221 = vmatprep.subr.mxu0 0.0
    %222 = vmatpush1.msra.mxu0 0.0
    %223 = vmatprep.subr.mxu0 0.0
    %224 = vmatpush1.msra.mxu0 0.0
    %225 = vmatprep.subr.mxu0 0.0
    %226 = vmatpush1.msra.mxu0 0.0
    %227 = vmatprep.subr.mxu0 0.0
    %228 = vmatpush1.msra.mxu0 0.0
    %229 = vmatprep.subr.mxu0 0.0
    %230 = vmatpush1.msra.mxu0 0.0
    %231 = vmatprep.subr.mxu0 0.0
    %232 = vmatpush1.msra.mxu0 0.0
    %233 = vmatprep.subr.mxu0 0.0
    %234 = vmatpush1.msra.mxu0 0.0
    %235 = vmatprep.subr.mxu0 0.0
    %236 = vmatpush1.msra.mxu0 0.0
    %237 = vmatprep.subr.mxu0 0.0
    %238 = vmatpush1.msra.mxu0 0.0
    %239 = vmatprep.subr.mxu0 0.0
    %240 = vmatpush1.msra.mxu0 0.0
    %241 = vmatprep.subr.mxu0 0.0
    %242 = vmatpush1.msra.mxu0 0.0
    %243 = vmatprep.subr.mxu0 0.0
    %244 = vmatpush1.msra.mxu0 0.0
    %245 = vmatprep.subr.mxu0 0.0
    %246 = vmatpush1.msra.mxu0 0.0
    %247 = vmatprep.mubr.f32.mxu0 0.0
    %248 = vmatmul.mubr.f32.gmra.mrb[0].mxu0 %v181
    %v249 = vpop.f32.mrb[0].mxu0
    %v250 = vadd.f32 0.0, %v249
    %v251 = vpop.f32.mrb[0].mxu0
    %252 = vdwg.mxu0
    %v253 = vadd.f32 %v174, %v250
    %v254 = vtanh.pop %v253
    %255 = vst.msk [vmem:[#allocation2] sm:$0x3] %vm164, %v254
    %s256 = scalar_lea.vmem [#allocation2], 2
    %v257 = vld [vmem:[%s256] sm:$0x3]
    %v258 = vld [vmem:[#allocation6] sm:$0xff]
    %v259 = vld [vmem:[#allocation6 + $0x8] sm:$0xff]
    %v260 = vld [vmem:[#allocation6 + $0x10] sm:$0xff]
    %v261 = vld [vmem:[#allocation6 + $0x18] sm:$0xff]
    %v263 = vsel %vm179, %v254, 0
    %265 = vmatprep.subr.mxu0 0.0
    %266 = vmatpush1.msra.mxu0 %v258
    %267 = vmatprep.subr.mxu0 0.0
    %268 = vmatpush1.msra.mxu0 %v259
    %269 = vmatprep.subr.mxu0 0.0
    %270 = vmatpush1.msra.mxu0 %v260
    %271 = vmatprep.subr.mxu0 0.0
    %272 = vmatpush1.msra.mxu0 %v261
    %273 = vmatprep.subr.mxu0 0.0
    %274 = vmatpush1.msra.mxu0 0.0
    %275 = vmatprep.subr.mxu0 0.0
    %276 = vmatpush1.msra.mxu0 0.0
    %277 = vmatprep.subr.mxu0 0.0
    %278 = vmatpush1.msra.mxu0 0.0
    %279 = vmatprep.subr.mxu0 0.0
    %280 = vmatpush1.msra.mxu0 0.0
    %281 = vmatprep.subr.mxu0 0.0
    %282 = vmatpush1.msra.mxu0 0.0
    %283 = vmatprep.subr.mxu0 0.0
    %284 = vmatpush1.msra.mxu0 0.0
    %285 = vmatprep.subr.mxu0 0.0
    %286 = vmatpush1.msra.mxu0 0.0
    %287 = vmatprep.subr.mxu0 0.0
    %288 = vmatpush1.msra.mxu0 0.0
    %289 = vmatprep.subr.mxu0 0.0
    %290 = vmatpush1.msra.mxu0 0.0
    %291 = vmatprep.subr.mxu0 0.0
    %292 = vmatpush1.msra.mxu0 0.0
    %293 = vmatprep.subr.mxu0 0.0
    %294 = vmatpush1.msra.mxu0 0.0
    %295 = vmatprep.subr.mxu0 0.0
    %296 = vmatpush1.msra.mxu0 0.0
    %297 = vmatprep.subr.mxu0 0.0
    %298 = vmatpush1.msra.mxu0 0.0
    %299 = vmatprep.subr.mxu0 0.0
    %300 = vmatpush1.msra.mxu0 0.0
    %301 = vmatprep.subr.mxu0 0.0
    %302 = vmatpush1.msra.mxu0 0.0
    %303 = vmatprep.subr.mxu0 0.0
    %304 = vmatpush1.msra.mxu0 0.0
    %305 = vmatprep.subr.mxu0 0.0
    %306 = vmatpush1.msra.mxu0 0.0
    %307 = vmatprep.subr.mxu0 0.0
    %308 = vmatpush1.msra.mxu0 0.0
    %309 = vmatprep.subr.mxu0 0.0
    %310 = vmatpush1.msra.mxu0 0.0
    %311 = vmatprep.subr.mxu0 0.0
    %312 = vmatpush1.msra.mxu0 0.0
    %313 = vmatprep.subr.mxu0 0.0
    %314 = vmatpush1.msra.mxu0 0.0
    %315 = vmatprep.subr.mxu0 0.0
    %316 = vmatpush1.msra.mxu0 0.0
    %317 = vmatprep.subr.mxu0 0.0
    %318 = vmatpush1.msra.mxu0 0.0
    %319 = vmatprep.subr.mxu0 0.0
    %320 = vmatpush1.msra.mxu0 0.0
    %321 = vmatprep.subr.mxu0 0.0
    %322 = vmatpush1.msra.mxu0 0.0
    %323 = vmatprep.subr.mxu0 0.0
    %324 = vmatpush1.msra.mxu0 0.0
    %325 = vmatprep.subr.mxu0 0.0
    %326 = vmatpush1.msra.mxu0 0.0
    %327 = vmatprep.subr.mxu0 0.0
    %328 = vmatpush1.msra.mxu0 0.0
    %329 = vmatprep.mubr.f32.mxu0 0.0
    %330 = vmatmul.mubr.f32.gmra.mrb[0].mxu0 %v263
    %v331 = vpop.f32.mrb[0].mxu0
    %v332 = vadd.f32 0.0, %v331
    %v333 = vpop.f32.mrb[0].mxu0
    %334 = vdwg.mxu0
    %v335 = vadd.f32 %v257, %v332
    %v336 = vtanh.pop %v335
    %337 = vst.msk [vmem:[%s256] sm:$0x3] %vm164, %v336
    %s338 = scalar_lea.vmem [#allocation2], 4
    %v339 = vld [vmem:[%s338] sm:$0x3]
    %v340 = vld [vmem:[#allocation6] sm:$0xff]
    %v341 = vld [vmem:[#allocation6 + $0x8] sm:$0xff]
    %v342 = vld [vmem:[#allocation6 + $0x10] sm:$0xff]
    %v343 = vld [vmem:[#allocation6 + $0x18] sm:$0xff]
    %v345 = vsel %vm179, %v336, 0
    %347 = vmatprep.subr.mxu0 0.0
    %348 = vmatpush1.msra.mxu0 %v340
    %349 = vmatprep.subr.mxu0 0.0
    %350 = vmatpush1.msra.mxu0 %v341
    %351 = vmatprep.subr.mxu0 0.0
    %352 = vmatpush1.msra.mxu0 %v342
    %353 = vmatprep.subr.mxu0 0.0
    %354 = vmatpush1.msra.mxu0 %v343
    %355 = vmatprep.subr.mxu0 0.0
    %356 = vmatpush1.msra.mxu0 0.0
    %357 = vmatprep.subr.mxu0 0.0
    %358 = vmatpush1.msra.mxu0 0.0
    %359 = vmatprep.subr.mxu0 0.0
    %360 = vmatpush1.msra.mxu0 0.0
    %361 = vmatprep.subr.mxu0 0.0
    %362 = vmatpush1.msra.mxu0 0.0
    %363 = vmatprep.subr.mxu0 0.0
    %364 = vmatpush1.msra.mxu0 0.0
    %365 = vmatprep.subr.mxu0 0.0
    %366 = vmatpush1.msra.mxu0 0.0
    %367 = vmatprep.subr.mxu0 0.0
    %368 = vmatpush1.msra.mxu0 0.0
    %369 = vmatprep.subr.mxu0 0.0
    %370 = vmatpush1.msra.mxu0 0.0
    %371 = vmatprep.subr.mxu0 0.0
    %372 = vmatpush1.msra.mxu0 0.0
    %373 = vmatprep.subr.mxu0 0.0
    %374 = vmatpush1.msra.mxu0 0.0
    %375 = vmatprep.subr.mxu0 0.0
    %376 = vmatpush1.msra.mxu0 0.0
    %377 = vmatprep.subr.mxu0 0.0
    %378 = vmatpush1.msra.mxu0 0.0
    %379 = vmatprep.subr.mxu0 0.0
    %380 = vmatpush1.msra.mxu0 0.0
    %381 = vmatprep.subr.mxu0 0.0
    %382 = vmatpush1.msra.mxu0 0.0
    %383 = vmatprep.subr.mxu0 0.0
    %384 = vmatpush1.msra.mxu0 0.0
    %385 = vmatprep.subr.mxu0 0.0
    %386 = vmatpush1.msra.mxu0 0.0
    %387 = vmatprep.subr.mxu0 0.0
    %388 = vmatpush1.msra.mxu0 0.0
    %389 = vmatprep.subr.mxu0 0.0
    %390 = vmatpush1.msra.mxu0 0.0
    %391 = vmatprep.subr.mxu0 0.0
    %392 = vmatpush1.msra.mxu0 0.0
    %393 = vmatprep.subr.mxu0 0.0
    %394 = vmatpush1.msra.mxu0 0.0
    %395 = vmatprep.subr.mxu0 0.0
    %396 = vmatpush1.msra.mxu0 0.0
    %397 = vmatprep.subr.mxu0 0.0
    %398 = vmatpush1.msra.mxu0 0.0
    %399 = vmatprep.subr.mxu0 0.0
    %400 = vmatpush1.msra.mxu0 0.0
    %401 = vmatprep.subr.mxu0 0.0
    %402 = vmatpush1.msra.mxu0 0.0
    %403 = vmatprep.subr.mxu0 0.0
    %404 = vmatpush1.msra.mxu0 0.0
    %405 = vmatprep.subr.mxu0 0.0
    %406 = vmatpush1.msra.mxu0 0.0
    %407 = vmatprep.subr.mxu0 0.0
    %408 = vmatpush1.msra.mxu0 0.0
    %409 = vmatprep.subr.mxu0 0.0
    %410 = vmatpush1.msra.mxu0 0.0
    %411 = vmatprep.mubr.f32.mxu0 0.0
    %412 = vmatmul.mubr.f32.gmra.mrb[0].mxu0 %v345
    %v413 = vpop.f32.mrb[0].mxu0
    %v414 = vadd.f32 0.0, %v413
    %v415 = vpop.f32.mrb[0].mxu0
    %416 = vdwg.mxu0
    %v417 = vadd.f32 %v339, %v414
    %v418 = vtanh.pop %v417
    %419 = vst.msk [vmem:[%s338] sm:$0x3] %vm164, %v418
    %s420 = scalar_lea.vmem [#allocation2], 6
    %v421 = vld [vmem:[%s420] sm:$0x3]
    %v422 = vld [vmem:[#allocation6] sm:$0xff]
    %v423 = vld [vmem:[#allocation6 + $0x8] sm:$0xff]
    %v424 = vld [vmem:[#allocation6 + $0x10] sm:$0xff]
    %v425 = vld [vmem:[#allocation6 + $0x18] sm:$0xff]
    %v427 = vsel %vm179, %v418, 0
    %429 = vmatprep.subr.mxu0 0.0
    %430 = vmatpush1.msra.mxu0 %v422
    %431 = vmatprep.subr.mxu0 0.0
    %432 = vmatpush1.msra.mxu0 %v423
    %433 = vmatprep.subr.mxu0 0.0
    %434 = vmatpush1.msra.mxu0 %v424
    %435 = vmatprep.subr.mxu0 0.0
    %436 = vmatpush1.msra.mxu0 %v425
    %437 = vmatprep.subr.mxu0 0.0
    %438 = vmatpush1.msra.mxu0 0.0
    %439 = vmatprep.subr.mxu0 0.0
    %440 = vmatpush1.msra.mxu0 0.0
    %441 = vmatprep.subr.mxu0 0.0
    %442 = vmatpush1.msra.mxu0 0.0
    %443 = vmatprep.subr.mxu0 0.0
    %444 = vmatpush1.msra.mxu0 0.0
    %445 = vmatprep.subr.mxu0 0.0
    %446 = vmatpush1.msra.mxu0 0.0
    %447 = vmatprep.subr.mxu0 0.0
    %448 = vmatpush1.msra.mxu0 0.0
    %449 = vmatprep.subr.mxu0 0.0
    %450 = vmatpush1.msra.mxu0 0.0
    %451 = vmatprep.subr.mxu0 0.0
    %452 = vmatpush1.msra.mxu0 0.0
    %453 = vmatprep.subr.mxu0 0.0
    %454 = vmatpush1.msra.mxu0 0.0
    %455 = vmatprep.subr.mxu0 0.0
    %456 = vmatpush1.msra.mxu0 0.0
    %457 = vmatprep.subr.mxu0 0.0
    %458 = vmatpush1.msra.mxu0 0.0
    %459 = vmatprep.subr.mxu0 0.0
    %460 = vmatpush1.msra.mxu0 0.0
    %461 = vmatprep.subr.mxu0 0.0
    %462 = vmatpush1.msra.mxu0 0.0
    %463 = vmatprep.subr.mxu0 0.0
    %464 = vmatpush1.msra.mxu0 0.0
    %465 = vmatprep.subr.mxu0 0.0
    %466 = vmatpush1.msra.mxu0 0.0
    %467 = vmatprep.subr.mxu0 0.0
    %468 = vmatpush1.msra.mxu0 0.0
    %469 = vmatprep.subr.mxu0 0.0
    %470 = vmatpush1.msra.mxu0 0.0
    %471 = vmatprep.subr.mxu0 0.0
    %472 = vmatpush1.msra.mxu0 0.0
    %473 = vmatprep.subr.mxu0 0.0
    %474 = vmatpush1.msra.mxu0 0.0
    %475 = vmatprep.subr.mxu0 0.0
    %476 = vmatpush1.msra.mxu0 0.0
    %477 = vmatprep.subr.mxu0 0.0
    %478 = vmatpush1.msra.mxu0 0.0
    %479 = vmatprep.subr.mxu0 0.0
    %480 = vmatpush1.msra.mxu0 0.0
    %481 = vmatprep.subr.mxu0 0.0
    %482 = vmatpush1.msra.mxu0 0.0
    %483 = vmatprep.subr.mxu0 0.0
    %484 = vmatpush1.msra.mxu0 0.0
    %485 = vmatprep.subr.mxu0 0.0
    %486 = vmatpush1.msra.mxu0 0.0
    %487 = vmatprep.subr.mxu0 0.0
    %488 = vmatpush1.msra.mxu0 0.0
    %489 = vmatprep.subr.mxu0 0.0
    %490 = vmatpush1.msra.mxu0 0.0
    %491 = vmatprep.subr.mxu0 0.0
    %492 = vmatpush1.msra.mxu0 0.0
    %493 = vmatprep.mubr.f32.mxu0 0.0
    %494 = vmatmul.mubr.f32.gmra.mrb[0].mxu0 %v427
    %v495 = vpop.f32.mrb[0].mxu0
    %v496 = vadd.f32 0.0, %v495
    %v497 = vpop.f32.mrb[0].mxu0
    %498 = vdwg.mxu0
    %v499 = vadd.f32 %v421, %v496
    %v500 = vtanh.pop %v499
    %501 = vst.msk [vmem:[%s420] sm:$0x3] %vm164, %v500
    %s502 = scalar_lea.vmem [#allocation2], 8
    %v503 = vld [vmem:[%s502] sm:$0x3]
    %v504 = vld [vmem:[#allocation6] sm:$0xff]
    %v505 = vld [vmem:[#allocation6 + $0x8] sm:$0xff]
    %v506 = vld [vmem:[#allocation6 + $0x10] sm:$0xff]
    %v507 = vld [vmem:[#allocation6 + $0x18] sm:$0xff]
    %v509 = vsel %vm179, %v500, 0
    %511 = vmatprep.subr.mxu0 0.0
    %512 = vmatpush1.msra.mxu0 %v504
    %513 = vmatprep.subr.mxu0 0.0
    %514 = vmatpush1.msra.mxu0 %v505
    %515 = vmatprep.subr.mxu0 0.0
    %516 = vmatpush1.msra.mxu0 %v506
    %517 = vmatprep.subr.mxu0 0.0
    %518 = vmatpush1.msra.mxu0 %v507
    %519 = vmatprep.subr.mxu0 0.0
    %520 = vmatpush1.msra.mxu0 0.0
    %521 = vmatprep.subr.mxu0 0.0
    %522 = vmatpush1.msra.mxu0 0.0
    %523 = vmatprep.subr.mxu0 0.0
    %524 = vmatpush1.msra.mxu0 0.0
    %525 = vmatprep.subr.mxu0 0.0
    %526 = vmatpush1.msra.mxu0 0.0
    %527 = vmatprep.subr.mxu0 0.0
    %528 = vmatpush1.msra.mxu0 0.0
    %529 = vmatprep.subr.mxu0 0.0
    %530 = vmatpush1.msra.mxu0 0.0
    %531 = vmatprep.subr.mxu0 0.0
    %532 = vmatpush1.msra.mxu0 0.0
    %533 = vmatprep.subr.mxu0 0.0
    %534 = vmatpush1.msra.mxu0 0.0
    %535 = vmatprep.subr.mxu0 0.0
    %536 = vmatpush1.msra.mxu0 0.0
    %537 = vmatprep.subr.mxu0 0.0
    %538 = vmatpush1.msra.mxu0 0.0
    %539 = vmatprep.subr.mxu0 0.0
    %540 = vmatpush1.msra.mxu0 0.0
    %541 = vmatprep.subr.mxu0 0.0
    %542 = vmatpush1.msra.mxu0 0.0
    %543 = vmatprep.subr.mxu0 0.0
    %544 = vmatpush1.msra.mxu0 0.0
    %545 = vmatprep.subr.mxu0 0.0
    %546 = vmatpush1.msra.mxu0 0.0
    %547 = vmatprep.subr.mxu0 0.0
    %548 = vmatpush1.msra.mxu0 0.0
    %549 = vmatprep.subr.mxu0 0.0
    %550 = vmatpush1.msra.mxu0 0.0
    %551 = vmatprep.subr.mxu0 0.0
    %552 = vmatpush1.msra.mxu0 0.0
    %553 = vmatprep.subr.mxu0 0.0
    %554 = vmatpush1.msra.mxu0 0.0
    %555 = vmatprep.subr.mxu0 0.0
    %556 = vmatpush1.msra.mxu0 0.0
    %557 = vmatprep.subr.mxu0 0.0
    %558 = vmatpush1.msra.mxu0 0.0
    %559 = vmatprep.subr.mxu0 0.0
    %560 = vmatpush1.msra.mxu0 0.0
    %561 = vmatprep.subr.mxu0 0.0
    %562 = vmatpush1.msra.mxu0 0.0
    %563 = vmatprep.subr.mxu0 0.0
    %564 = vmatpush1.msra.mxu0 0.0
    %565 = vmatprep.subr.mxu0 0.0
    %566 = vmatpush1.msra.mxu0 0.0
    %567 = vmatprep.subr.mxu0 0.0
    %568 = vmatpush1.msra.mxu0 0.0
    %569 = vmatprep.subr.mxu0 0.0
    %570 = vmatpush1.msra.mxu0 0.0
    %571 = vmatprep.subr.mxu0 0.0
    %572 = vmatpush1.msra.mxu0 0.0
    %573 = vmatprep.subr.mxu0 0.0
    %574 = vmatpush1.msra.mxu0 0.0
    %575 = vmatprep.mubr.f32.mxu0 0.0
    %576 = vmatmul.mubr.f32.gmra.mrb[0].mxu0 %v509
    %v577 = vpop.f32.mrb[0].mxu0
    %v578 = vadd.f32 0.0, %v577
    %v579 = vpop.f32.mrb[0].mxu0
    %580 = vdwg.mxu0
    %v581 = vadd.f32 %v503, %v578
    %v582 = vtanh.pop %v581
    %583 = vst.msk [vmem:[%s502] sm:$0x3] %vm164, %v582
    %s584 = scalar_lea.vmem [#allocation2], 10
    %v585 = vld [vmem:[%s584] sm:$0x3]
    %v586 = vld [vmem:[#allocation6] sm:$0xff]
    %v587 = vld [vmem:[#allocation6 + $0x8] sm:$0xff]
    %v588 = vld [vmem:[#allocation6 + $0x10] sm:$0xff]
    %v589 = vld [vmem:[#allocation6 + $0x18] sm:$0xff]
    %v591 = vsel %vm179, %v582, 0
    %593 = vmatprep.subr.mxu0 0.0
    %594 = vmatpush1.msra.mxu0 %v586
    %595 = vmatprep.subr.mxu0 0.0
    %596 = vmatpush1.msra.mxu0 %v587
    %597 = vmatprep.subr.mxu0 0.0
    %598 = vmatpush1.msra.mxu0 %v588
    %599 = vmatprep.subr.mxu0 0.0
    %600 = vmatpush1.msra.mxu0 %v589
    %601 = vmatprep.subr.mxu0 0.0
    %602 = vmatpush1.msra.mxu0 0.0
    %603 = vmatprep.subr.mxu0 0.0
    %604 = vmatpush1.msra.mxu0 0.0
    %605 = vmatprep.subr.mxu0 0.0
    %606 = vmatpush1.msra.mxu0 0.0
    %607 = vmatprep.subr.mxu0 0.0
    %608 = vmatpush1.msra.mxu0 0.0
    %609 = vmatprep.subr.mxu0 0.0
    %610 = vmatpush1.msra.mxu0 0.0
    %611 = vmatprep.subr.mxu0 0.0
    %612 = vmatpush1.msra.mxu0 0.0
    %613 = vmatprep.subr.mxu0 0.0
    %614 = vmatpush1.msra.mxu0 0.0
    %615 = vmatprep.subr.mxu0 0.0
    %616 = vmatpush1.msra.mxu0 0.0
    %617 = vmatprep.subr.mxu0 0.0
    %618 = vmatpush1.msra.mxu0 0.0
    %619 = vmatprep.subr.mxu0 0.0
    %620 = vmatpush1.msra.mxu0 0.0
    %621 = vmatprep.subr.mxu0 0.0
    %622 = vmatpush1.msra.mxu0 0.0
    %623 = vmatprep.subr.mxu0 0.0
    %624 = vmatpush1.msra.mxu0 0.0
    %625 = vmatprep.subr.mxu0 0.0
    %626 = vmatpush1.msra.mxu0 0.0
    %627 = vmatprep.subr.mxu0 0.0
    %628 = vmatpush1.msra.mxu0 0.0
    %629 = vmatprep.subr.mxu0 0.0
    %630 = vmatpush1.msra.mxu0 0.0
    %631 = vmatprep.subr.mxu0 0.0
    %632 = vmatpush1.msra.mxu0 0.0
    %633 = vmatprep.subr.mxu0 0.0
    %634 = vmatpush1.msra.mxu0 0.0
    %635 = vmatprep.subr.mxu0 0.0
    %636 = vmatpush1.msra.mxu0 0.0
    %637 = vmatprep.subr.mxu0 0.0
    %638 = vmatpush1.msra.mxu0 0.0
    %639 = vmatprep.subr.mxu0 0.0
    %640 = vmatpush1.msra.mxu0 0.0
    %641 = vmatprep.subr.mxu0 0.0
    %642 = vmatpush1.msra.mxu0 0.0
    %643 = vmatprep.subr.mxu0 0.0
    %644 = vmatpush1.msra.mxu0 0.0
    %645 = vmatprep.subr.mxu0 0.0
    %646 = vmatpush1.msra.mxu0 0.0
    %647 = vmatprep.subr.mxu0 0.0
    %648 = vmatpush1.msra.mxu0 0.0
    %649 = vmatprep.subr.mxu0 0.0
    %650 = vmatpush1.msra.mxu0 0.0
    %651 = vmatprep.subr.mxu0 0.0
    %652 = vmatpush1.msra.mxu0 0.0
    %653 = vmatprep.subr.mxu0 0.0
    %654 = vmatpush1.msra.mxu0 0.0
    %655 = vmatprep.subr.mxu0 0.0
    %656 = vmatpush1.msra.mxu0 0.0
    %657 = vmatprep.mubr.f32.mxu0 0.0
    %658 = vmatmul.mubr.f32.gmra.mrb[0].mxu0 %v591
    %v659 = vpop.f32.mrb[0].mxu0
    %v660 = vadd.f32 0.0, %v659
    %v661 = vpop.f32.mrb[0].mxu0
    %662 = vdwg.mxu0
    %v663 = vadd.f32 %v585, %v660
    %v664 = vtanh.pop %v663
    %665 = vst.msk [vmem:[%s584] sm:$0x3] %vm164, %v664
    %s666 = scalar_lea.vmem [#allocation2], 12
    %v667 = vld [vmem:[%s666] sm:$0x3]
    %v668 = vld [vmem:[#allocation6] sm:$0xff]
    %v669 = vld [vmem:[#allocation6 + $0x8] sm:$0xff]
    %v670 = vld [vmem:[#allocation6 + $0x10] sm:$0xff]
    %v671 = vld [vmem:[#allocation6 + $0x18] sm:$0xff]
    %v673 = vsel %vm179, %v664, 0
    %675 = vmatprep.subr.mxu0 0.0
    %676 = vmatpush1.msra.mxu0 %v668
    %677 = vmatprep.subr.mxu0 0.0
    %678 = vmatpush1.msra.mxu0 %v669
    %679 = vmatprep.subr.mxu0 0.0
    %680 = vmatpush1.msra.mxu0 %v670
    %681 = vmatprep.subr.mxu0 0.0
    %682 = vmatpush1.msra.mxu0 %v671
    %683 = vmatprep.subr.mxu0 0.0
    %684 = vmatpush1.msra.mxu0 0.0
    %685 = vmatprep.subr.mxu0 0.0
    %686 = vmatpush1.msra.mxu0 0.0
    %687 = vmatprep.subr.mxu0 0.0
    %688 = vmatpush1.msra.mxu0 0.0
    %689 = vmatprep.subr.mxu0 0.0
    %690 = vmatpush1.msra.mxu0 0.0
    %691 = vmatprep.subr.mxu0 0.0
    %692 = vmatpush1.msra.mxu0 0.0
    %693 = vmatprep.subr.mxu0 0.0
    %694 = vmatpush1.msra.mxu0 0.0
    %695 = vmatprep.subr.mxu0 0.0
    %696 = vmatpush1.msra.mxu0 0.0
    %697 = vmatprep.subr.mxu0 0.0
    %698 = vmatpush1.msra.mxu0 0.0
    %699 = vmatprep.subr.mxu0 0.0
    %700 = vmatpush1.msra.mxu0 0.0
    %701 = vmatprep.subr.mxu0 0.0
    %702 = vmatpush1.msra.mxu0 0.0
    %703 = vmatprep.subr.mxu0 0.0
    %704 = vmatpush1.msra.mxu0 0.0
    %705 = vmatprep.subr.mxu0 0.0
    %706 = vmatpush1.msra.mxu0 0.0
    %707 = vmatprep.subr.mxu0 0.0
    %708 = vmatpush1.msra.mxu0 0.0
    %709 = vmatprep.subr.mxu0 0.0
    %710 = vmatpush1.msra.mxu0 0.0
    %711 = vmatprep.subr.mxu0 0.0
    %712 = vmatpush1.msra.mxu0 0.0
    %713 = vmatprep.subr.mxu0 0.0
    %714 = vmatpush1.msra.mxu0 0.0
    %715 = vmatprep.subr.mxu0 0.0
    %716 = vmatpush1.msra.mxu0 0.0
    %717 = vmatprep.subr.mxu0 0.0
    %718 = vmatpush1.msra.mxu0 0.0
    %719 = vmatprep.subr.mxu0 0.0
    %720 = vmatpush1.msra.mxu0 0.0
    %721 = vmatprep.subr.mxu0 0.0
    %722 = vmatpush1.msra.mxu0 0.0
    %723 = vmatprep.subr.mxu0 0.0
    %724 = vmatpush1.msra.mxu0 0.0
    %725 = vmatprep.subr.mxu0 0.0
    %726 = vmatpush1.msra.mxu0 0.0
    %727 = vmatprep.subr.mxu0 0.0
    %728 = vmatpush1.msra.mxu0 0.0
    %729 = vmatprep.subr.mxu0 0.0
    %730 = vmatpush1.msra.mxu0 0.0
    %731 = vmatprep.subr.mxu0 0.0
    %732 = vmatpush1.msra.mxu0 0.0
    %733 = vmatprep.subr.mxu0 0.0
    %734 = vmatpush1.msra.mxu0 0.0
    %735 = vmatprep.subr.mxu0 0.0
    %736 = vmatpush1.msra.mxu0 0.0
    %737 = vmatprep.subr.mxu0 0.0
    %738 = vmatpush1.msra.mxu0 0.0
    %739 = vmatprep.mubr.f32.mxu0 0.0
    %740 = vmatmul.mubr.f32.gmra.mrb[0].mxu0 %v673
    %v741 = vpop.f32.mrb[0].mxu0
    %v742 = vadd.f32 0.0, %v741
    %v743 = vpop.f32.mrb[0].mxu0
    %744 = vdwg.mxu0
    %v745 = vadd.f32 %v667, %v742
    %v746 = vtanh.pop %v745
    %747 = vst.msk [vmem:[%s666] sm:$0x3] %vm164, %v746
    %s748 = scalar_lea.vmem [#allocation2], 14
    %v749 = vld [vmem:[%s748] sm:$0x3]
    %v750 = vld [vmem:[#allocation6] sm:$0xff]
    %v751 = vld [vmem:[#allocation6 + $0x8] sm:$0xff]
    %v752 = vld [vmem:[#allocation6 + $0x10] sm:$0xff]
    %v753 = vld [vmem:[#allocation6 + $0x18] sm:$0xff]
    %v755 = vsel %vm179, %v746, 0
    %757 = vmatprep.subr.mxu0 0.0
    %758 = vmatpush1.msra.mxu0 %v750
    %759 = vmatprep.subr.mxu0 0.0
    %760 = vmatpush1.msra.mxu0 %v751
    %761 = vmatprep.subr.mxu0 0.0
    %762 = vmatpush1.msra.mxu0 %v752
    %763 = vmatprep.subr.mxu0 0.0
    %764 = vmatpush1.msra.mxu0 %v753
    %765 = vmatprep.subr.mxu0 0.0
    %766 = vmatpush1.msra.mxu0 0.0
    %767 = vmatprep.subr.mxu0 0.0
    %768 = vmatpush1.msra.mxu0 0.0
    %769 = vmatprep.subr.mxu0 0.0
    %770 = vmatpush1.msra.mxu0 0.0
    %771 = vmatprep.subr.mxu0 0.0
    %772 = vmatpush1.msra.mxu0 0.0
    %773 = vmatprep.subr.mxu0 0.0
    %774 = vmatpush1.msra.mxu0 0.0
    %775 = vmatprep.subr.mxu0 0.0
    %776 = vmatpush1.msra.mxu0 0.0
    %777 = vmatprep.subr.mxu0 0.0
    %778 = vmatpush1.msra.mxu0 0.0
    %779 = vmatprep.subr.mxu0 0.0
    %780 = vmatpush1.msra.mxu0 0.0
    %781 = vmatprep.subr.mxu0 0.0
    %782 = vmatpush1.msra.mxu0 0.0
    %783 = vmatprep.subr.mxu0 0.0
    %784 = vmatpush1.msra.mxu0 0.0
    %785 = vmatprep.subr.mxu0 0.0
    %786 = vmatpush1.msra.mxu0 0.0
    %787 = vmatprep.subr.mxu0 0.0
    %788 = vmatpush1.msra.mxu0 0.0
    %789 = vmatprep.subr.mxu0 0.0
    %790 = vmatpush1.msra.mxu0 0.0
    %791 = vmatprep.subr.mxu0 0.0
    %792 = vmatpush1.msra.mxu0 0.0
    %793 = vmatprep.subr.mxu0 0.0
    %794 = vmatpush1.msra.mxu0 0.0
    %795 = vmatprep.subr.mxu0 0.0
    %796 = vmatpush1.msra.mxu0 0.0
    %797 = vmatprep.subr.mxu0 0.0
    %798 = vmatpush1.msra.mxu0 0.0
    %799 = vmatprep.subr.mxu0 0.0
    %800 = vmatpush1.msra.mxu0 0.0
    %801 = vmatprep.subr.mxu0 0.0
    %802 = vmatpush1.msra.mxu0 0.0
    %803 = vmatprep.subr.mxu0 0.0
    %804 = vmatpush1.msra.mxu0 0.0
    %805 = vmatprep.subr.mxu0 0.0
    %806 = vmatpush1.msra.mxu0 0.0
    %807 = vmatprep.subr.mxu0 0.0
    %808 = vmatpush1.msra.mxu0 0.0
    %809 = vmatprep.subr.mxu0 0.0
    %810 = vmatpush1.msra.mxu0 0.0
    %811 = vmatprep.subr.mxu0 0.0
    %812 = vmatpush1.msra.mxu0 0.0
    %813 = vmatprep.subr.mxu0 0.0
    %814 = vmatpush1.msra.mxu0 0.0
    %815 = vmatprep.subr.mxu0 0.0
    %816 = vmatpush1.msra.mxu0 0.0
    %817 = vmatprep.subr.mxu0 0.0
    %818 = vmatpush1.msra.mxu0 0.0
    %819 = vmatprep.subr.mxu0 0.0
    %820 = vmatpush1.msra.mxu0 0.0
    %821 = vmatprep.mubr.f32.mxu0 0.0
    %822 = vmatmul.mubr.f32.gmra.mrb[0].mxu0 %v755
    %v823 = vpop.f32.mrb[0].mxu0
    %v824 = vadd.f32 0.0, %v823
    %v825 = vpop.f32.mrb[0].mxu0
    %826 = vdwg.mxu0
    %v827 = vadd.f32 %v749, %v824
    %v828 = vtanh.pop %v827
    %829 = vst.msk [vmem:[%s748] sm:$0x3] %vm164, %v828
    %830 = vst.msk [vmem:[#allocation9] sm:$0x3] %vm164, %v828
    %v831 = vld [vmem:[#allocation2] sm:$0x3]
    %v832 = vld [vmem:[#allocation2 + $0x2] sm:$0x3]
    %v833 = vld [vmem:[#allocation2 + $0x4] sm:$0x3]
    %v834 = vld [vmem:[#allocation2 + $0x6] sm:$0x3]
    %v835 = vld [vmem:[#allocation2 + $0x8] sm:$0x3]
    %v836 = vld [vmem:[#allocation2 + $0xa] sm:$0x3]
    %v837 = vld [vmem:[#allocation2 + $0xc] sm:$0x3]
    %v838 = vld [vmem:[#allocation2 + $0xe] sm:$0x3]
    %v839 = vlaneseq
    %v840 = vshrl.u32 %v839, 7
    %v841 = vsub.s32 0, %v840
    %v842 = vrot.slane %v49, %v841
    %v843 = vmul.f32 %v831, %v842
    %v844 = vmul.f32 %v832, %v842
    %v845 = vmul.f32 %v833, %v842
    %v846 = vmul.f32 %v834, %v842
    %v847 = vmul.f32 %v835, %v842
    %v848 = vmul.f32 %v836, %v842
    %v849 = vmul.f32 %v837, %v842
    %v850 = vmul.f32 %v838, %v842
    %v851 = vsel %vm164, %v843, 0.0
    %852 = vadd.xlane.f32.xlu0 %v851
    %v853 = vpop.xlane.xlu0 %852
    %v854 = vsel %vm164, %v844, 0.0
    %855 = vadd.xlane.f32.xlu0 %v854
    %v856 = vpop.xlane.xlu0 %855
    %v857 = vsel %vm164, %v845, 0.0
    %858 = vadd.xlane.f32.xlu0 %v857
    %v859 = vpop.xlane.xlu0 %858
    %v860 = vsel %vm164, %v846, 0.0
    %861 = vadd.xlane.f32.xlu0 %v860
    %v862 = vpop.xlane.xlu0 %861
    %v863 = vsel %vm164, %v847, 0.0
    %864 = vadd.xlane.f32.xlu0 %v863
    %v865 = vpop.xlane.xlu0 %864
    %v866 = vsel %vm164, %v848, 0.0
    %867 = vadd.xlane.f32.xlu0 %v866
    %v868 = vpop.xlane.xlu0 %867
    %v869 = vsel %vm164, %v849, 0.0
    %870 = vadd.xlane.f32.xlu0 %v869
    %v871 = vpop.xlane.xlu0 %870
    %v872 = vsel %vm164, %v850, 0.0
    %873 = vadd.xlane.f32.xlu0 %v872
    %v874 = vpop.xlane.xlu0 %873
    %v883 = vlaneseq
    %v884 = vand.u32 %v883, 127
    %v885 = vlaneseq
    %v886 = vshrl.u32 %v885, 7
    %v887 = vsub.s32 %v884, %v886
    %v888 = vrot.slane %v853, %v887
    %v889 = vlaneseq
    %v890 = vshrl.u32 %v889, 7
    %v891 = vsub.s32 %v884, %v890
    %v892 = vrot.slane %v856, %v891
    %v893 = vlaneseq
    %v894 = vshrl.u32 %v893, 7
    %v895 = vsub.s32 %v884, %v894
    %v896 = vrot.slane %v859, %v895
    %v897 = vlaneseq
    %v898 = vshrl.u32 %v897, 7
    %v899 = vsub.s32 %v884, %v898
    %v900 = vrot.slane %v862, %v899
    %v901 = vlaneseq
    %v902 = vshrl.u32 %v901, 7
    %v903 = vsub.s32 %v884, %v902
    %v904 = vrot.slane %v865, %v903
    %v905 = vlaneseq
    %v906 = vshrl.u32 %v905, 7
    %v907 = vsub.s32 %v884, %v906
    %v908 = vrot.slane %v868, %v907
    %v909 = vlaneseq
    %v910 = vshrl.u32 %v909, 7
    %v911 = vsub.s32 %v884, %v910
    %v912 = vrot.slane %v871, %v911
    %v913 = vlaneseq
    %v914 = vshrl.u32 %v913, 7
    %v915 = vsub.s32 %v884, %v914
    %v916 = vrot.slane %v874, %v915
    %vm917 = vcmask 1041409
    %v918 = vsel %vm917, %v892, %v888
    %vm919 = vcmask 1042434
    %v920 = vsel %vm919, %v896, %v918
    %vm921 = vcmask 1043459
    %v922 = vsel %vm921, %v900, %v920
    %vm923 = vcmask 1044484
    %v924 = vsel %vm923, %v904, %v922
    %vm925 = vcmask 1045509
    %v926 = vsel %vm925, %v908, %v924
    %vm927 = vcmask 1046534
    %v928 = vsel %vm927, %v912, %v926
    %vm929 = vcmask 1047559
    %v930 = vsel %vm929, %v916, %v928
    %932 = vxpose.xlu0.b32.start [1/16] %v930, 128
    %933 = vxpose.xlu0.b32.cont [2/16] 0.0, 128
    %934 = vxpose.xlu0.b32.cont [3/16] 0.0, 128
    %935 = vxpose.xlu0.b32.cont [4/16] 0.0, 128
    %936 = vxpose.xlu0.b32.cont [5/16] 0.0, 128
    %937 = vxpose.xlu0.b32.cont [6/16] 0.0, 128
    %938 = vxpose.xlu0.b32.cont [7/16] 0.0, 128
    %939 = vxpose.xlu0.b32.cont [8/16] 0.0, 128
    %940 = vxpose.xlu0.b32.cont [9/16] 0.0, 128
    %941 = vxpose.xlu0.b32.cont [10/16] 0.0, 128
    %942 = vxpose.xlu0.b32.cont [11/16] 0.0, 128
    %943 = vxpose.xlu0.b32.cont [12/16] 0.0, 128
    %944 = vxpose.xlu0.b32.cont [13/16] 0.0, 128
    %945 = vxpose.xlu0.b32.cont [14/16] 0.0, 128
    %946 = vxpose.xlu0.b32.cont [15/16] 0.0, 128
    %947 = vxpose.xlu0.b32.end [16/16] 0.0, 128
    %v948 = vpop.trf.xlu0
    %v949 = vpop.trf.xlu0
    %v950 = vpop.trf.xlu0
    %v951 = vpop.trf.xlu0
    %v952 = vpop.trf.xlu0
    %v953 = vpop.trf.xlu0
    %v954 = vpop.trf.xlu0
    %v955 = vpop.trf.xlu0
    %v956 = vpop.trf.xlu0
    %v957 = vpop.trf.xlu0
    %v958 = vpop.trf.xlu0
    %v959 = vpop.trf.xlu0
    %v960 = vpop.trf.xlu0
    %v961 = vpop.trf.xlu0
    %v962 = vpop.trf.xlu0
    %v963 = vpop.trf.xlu0
    %s965 = vtos %v50
    %v966 = vstv %s965
    %v968 = vadd.f32 %v948, %v966
    %vm969 = vcmask 58368
    %970 = vst.msk [vmem:[#allocation8] sm:$0x3] %vm969, %v968
    // Predicated region
    $region26: #{tpu_custom_call.1} parent=1 // pred_check
      _
    $region27: #{tpu_custom_call.1} parent=1 // pred_check_branch
      %972 = sbr.rel (0) target = $region29
    $region28: #{tpu_custom_call.1} parent=1 // pred_region
      %s974 = ssub.s32 32, 32
      %975 = vsyncadd [#allocation5], %s974
      %s977 = sshll.u32 [#allocation8], 4
      %s978 = int_to_ptr.vmem [resolvable:$true] %s977
      %980 = dma.vmem_to_hbm [thread:$0]  %s978, 32, %s4, [#allocation5]
    $region29: #{tpu_custom_call.1} parent=1 // pred_fallthru
      _
    // Predicated region
    $region30: #{tpu_custom_call.1} parent=1 // pred_check
      _
    $region31: #{tpu_custom_call.1} parent=1 // pred_check_branch
      %982 = sbr.rel (0) target = $region33
    $region32: #{tpu_custom_call.1} parent=1 // pred_region
      %s984 = ssub.s32 32, 32
      %985 = vsyncadd [#allocation10], %s984
      %s987 = sshll.u32 [#allocation9], 4
      %s988 = int_to_ptr.vmem [resolvable:$true] %s987
      %990 = dma.vmem_to_hbm [thread:$0]  %s988, 32, %s5, [#allocation10]
    $region33: #{tpu_custom_call.1} parent=1 // pred_fallthru
      _
    // Predicated region
    $region34: #{tpu_custom_call.1} parent=1 // pred_check
      _
    $region35: #{tpu_custom_call.1} parent=1 // pred_check_branch
      %992 = sbr.rel (0) target = $region37
    $region36: #{tpu_custom_call.1} parent=1 // pred_region
      %993 = dma.done [#allocation5], 32
    $region37: #{tpu_custom_call.1} parent=1 // pred_fallthru
      _
    // Predicated region
    $region38: #{tpu_custom_call.1} parent=1 // pred_check
      _
    $region39: #{tpu_custom_call.1} parent=1 // pred_check_branch
      %995 = sbr.rel (0) target = $region41
    $region40: #{tpu_custom_call.1} parent=1 // pred_region
      %996 = dma.done [#allocation10], 32
    $region41: #{tpu_custom_call.1} parent=1 // pred_fallthru
      _
    %997 = vsyncpa [#allocation4], 1
    %998 = vsyncpa [#allocation7], 1
    %999 = vsyncpa [#allocation5], 1
    %1000 = vsyncpa [#allocation10], 1

</llo_original>
